<compile_context>
chip_gen: v7x
topology: tpu7x:2x2x1
jax: 0.10.0
libtpu: 0.0.40
codegen_flags: <defaults>
</compile_context>

<pallas_src>
import jax
import jax.numpy as jnp
from jax.experimental import pallas as pl
from jax.experimental.pallas import tpu as pltpu

_OUT_LANES = 128  # lane-dense padded output width (true output width is 3)


def _round_up(x, m):
    return (x + m - 1) // m * m


def _output_layer_kernel(rn_ref, hn_ref, w_in_ref, b_in_ref, wo_ref, bo_ref,
                         out_ref):
    # Fused: [rn|hn] @ [Wp^T;Wx^T] + (bp+bx) -> tanh -> @ W_out^T(pad) + b_out(pad)
    x = jnp.concatenate([rn_ref[...], hn_ref[...]], axis=-1)          # (tm, 2H) bf16
    h = jnp.tanh(
        jnp.dot(x, w_in_ref[...], preferred_element_type=jnp.float32)
        + b_in_ref[...])                                              # (tm, H) f32
    out = jnp.dot(h.astype(jnp.bfloat16), wo_ref[...],
                  preferred_element_type=jnp.float32) + bo_ref[...]   # (tm, 128) f32
    out_ref[...] = out.astype(out_ref.dtype)


def output_layer_forward(rN, hN, params, *, hidden_dim, tile_m=256):
    """rN, hN: arbitrary leading dims, last dim == hidden_dim. Returns (N, 3) f32."""
    H = hidden_dim
    rn2d = rN.reshape(-1, H)
    hn2d = hN.reshape(-1, H)
    N = rn2d.shape[0]
    assert hn2d.shape[0] == N

    wp_t, bp, wx_t, bx, wo_t, bo = params  # (H,H),(1,H),(H,H),(1,H),(H,3),(1,3)

    # --- host-side parameter prep (constant-folded / fused by XLA) ---
    w_in = jnp.concatenate([wp_t, wx_t], axis=0).astype(jnp.bfloat16)   # (2H, H)
    b_in = (bp + bx).astype(jnp.float32)                                # (1, H)
    wo_pad = jnp.zeros((H, _OUT_LANES), jnp.bfloat16).at[:, :3].set(
        wo_t.astype(jnp.bfloat16))                                      # (H, 128)
    bo_pad = jnp.zeros((1, _OUT_LANES), jnp.float32).at[:, :3].set(
        bo.astype(jnp.float32))                                         # (1, 128)

    # --- row tiling: multiple of 16 (bf16 sublanes); pad N, slice back after ---
    tile_m = max(16, min(tile_m, _round_up(N, 16)))
    Np = _round_up(N, tile_m)
    if Np != N:
        pad = ((0, Np - N), (0, 0))
        rn2d = jnp.pad(rn2d, pad)
        hn2d = jnp.pad(hn2d, pad)
    rn_bf = rn2d.astype(jnp.bfloat16)
    hn_bf = hn2d.astype(jnp.bfloat16)

    grid = (Np // tile_m,)
    row_spec = pl.BlockSpec((tile_m, H), lambda i: (i, 0))
    full = lambda shape: pl.BlockSpec(shape, lambda i: (0, 0))

    cost = pl.CostEstimate(
        flops=2 * Np * (2 * H) * H + 2 * Np * H * _OUT_LANES,
        transcendentals=Np * H,
        bytes_accessed=(2 * Np * H * 2                       # bf16 activations in
                        + (2 * H * H + H * _OUT_LANES) * 2   # bf16 weights
                        + (H + _OUT_LANES) * 4               # f32 biases
                        + Np * _OUT_LANES * 4))              # f32 padded output

    # VMEM budget: double-buffered row tiles + resident weights (with headroom),
    # clamped so it stays legal on v7x (64 MiB physical per TC).
    vmem_need = (4 * tile_m * H * 2                  # rn+hn, 2 bufs each, bf16
                 + 2 * tile_m * _OUT_LANES * 4       # out, 2 bufs, f32
                 + 2 * ((2 * H * H + H * _OUT_LANES) * 2 + (H + _OUT_LANES) * 4))
    vmem_limit = int(min(max(2 * vmem_need, 32 * 1024 * 1024),
                         60 * 1024 * 1024))

    out_padded = pl.pallas_call(
        _output_layer_kernel,
        out_shape=jax.ShapeDtypeStruct((Np, _OUT_LANES), jnp.float32),
        grid_spec=pltpu.PrefetchScalarGridSpec(
            num_scalar_prefetch=0,
            grid=grid,
            in_specs=[
                row_spec,                       # rn rows   (tm, H)  bf16
                row_spec,                       # hn rows   (tm, H)  bf16
                full((2 * H, H)),               # [Wp^T ; Wx^T]      bf16
                full((1, H)),                   # bp + bx            f32
                full((H, _OUT_LANES)),          # W_out^T zero-padded to 128 lanes
                full((1, _OUT_LANES)),          # b_out zero-padded
            ],
            out_specs=pl.BlockSpec((tile_m, _OUT_LANES), lambda i: (i, 0)),
        ),
        compiler_params=pltpu.CompilerParams(
            dimension_semantics=("parallel",),
            vmem_limit_bytes=vmem_limit),
        cost_estimate=cost,
    )(rn_bf, hn_bf, w_in, b_in, wo_pad, bo_pad)

    return out_padded[:N, :3]


def init_params(key, hidden_dim):
    """Deterministic synthetic init (uniform like torch.nn.Linear default)."""
    H = hidden_dim
    ks = jax.random.split(key, 6)
    bound_h = 1.0 / jnp.sqrt(H)
    wp_t = jax.random.uniform(ks[0], (H, H), jnp.float32, -bound_h, bound_h)
    bp = jax.random.uniform(ks[1], (1, H), jnp.float32, -bound_h, bound_h)
    wx_t = jax.random.uniform(ks[2], (H, H), jnp.float32, -bound_h, bound_h)
    bx = jax.random.uniform(ks[3], (1, H), jnp.float32, -bound_h, bound_h)
    wo_t = jax.random.uniform(ks[4], (H, 3), jnp.float32, -bound_h, bound_h)
    bo = jax.random.uniform(ks[5], (1, 3), jnp.float32, -bound_h, bound_h)
    return wp_t, bp, wx_t, bx, wo_t, bo


def reference_forward(rN, hN, params, hidden_dim):
    H = hidden_dim
    wp_t, bp, wx_t, bx, wo_t, bo = params
    rn2d = rN.reshape(-1, H)
    hn2d = hN.reshape(-1, H)
    h = jnp.tanh(rn2d @ wp_t + bp + hn2d @ wx_t + bx)
    return h @ wo_t + bo


if __name__ == "__main__":
    HIDDEN = 128      # hidden_dim
    BATCH = 2         # leading dims (flattened inside forward)
    SEQ = 8           # -> N = 16 rows after to_2D

    key = jax.random.PRNGKey(0)
    k_rn, k_hn, k_params = jax.random.split(key, 3)

    rN = jax.random.normal(k_rn, (BATCH, SEQ, HIDDEN), jnp.float32)
    hN = jax.random.normal(k_hn, (BATCH, SEQ, HIDDEN), jnp.float32)
    params = init_params(k_params, HIDDEN)

    out = output_layer_forward(rN, hN, params, hidden_dim=HIDDEN)
    out = jax.block_until_ready(out)

    ref = reference_forward(rN, hN, params, HIDDEN)
    assert out.shape == (BATCH * SEQ, 3)
    # bf16 operands with f32 accumulation -> slightly looser tolerance than pure f32.
    assert jnp.allclose(out, ref, atol=2e-2, rtol=2e-2), (
        float(jnp.max(jnp.abs(out - ref))))

    print("KERNEL_OK")
</pallas_src>

<mosaic_0001>
module attributes {stable_mosaic.version = 11 : i64} {
  func.func @_output_layer_kernel(%arg0: i32, %arg1: memref<16x128xbf16, #tpu.memory_space<vmem>>, %arg2: memref<16x128xbf16, #tpu.memory_space<vmem>>, %arg3: memref<256x128xbf16, #tpu.memory_space<vmem>>, %arg4: memref<1x128xf32, #tpu.memory_space<vmem>>, %arg5: memref<128x128xbf16, #tpu.memory_space<vmem>>, %arg6: memref<1x128xf32, #tpu.memory_space<vmem>>, %arg7: memref<16x128xf32, #tpu.memory_space<vmem>>) attributes {dimension_semantics = [#tpu.dimension_semantics<parallel>], iteration_bounds = array<i64: 1>, scalar_prefetch = 0 : i64, scratch_operands = 0 : i64, tpu.core_type = #tpu.core_type<tc>, window_params = [{transform_indices = @transform_0, window_bounds = array<i64: 16, 128>}, {transform_indices = @transform_1, window_bounds = array<i64: 16, 128>}, {pipeline_mode = #tpu.pipeline_mode<synchronous>, transform_indices = @transform_2, window_bounds = array<i64: 256, 128>}, {pipeline_mode = #tpu.pipeline_mode<synchronous>, transform_indices = @transform_3, window_bounds = array<i64: 1, 128>}, {pipeline_mode = #tpu.pipeline_mode<synchronous>, transform_indices = @transform_4, window_bounds = array<i64: 128, 128>}, {pipeline_mode = #tpu.pipeline_mode<synchronous>, transform_indices = @transform_5, window_bounds = array<i64: 1, 128>}, {transform_indices = @transform_6, window_bounds = array<i64: 16, 128>}]} {
    %c0 = arith.constant 0 : index
    %c0_0 = arith.constant 0 : index
    %0 = vector.load %arg1[%c0, %c0_0] : memref<16x128xbf16, #tpu.memory_space<vmem>>, vector<16x128xbf16>
    %c0_1 = arith.constant 0 : index
    %c0_2 = arith.constant 0 : index
    %1 = vector.load %arg2[%c0_1, %c0_2] : memref<16x128xbf16, #tpu.memory_space<vmem>>, vector<16x128xbf16>
    %2 = tpu.concatenate %0, %1 in 1 : vector<16x128xbf16>, vector<16x128xbf16> -> vector<16x256xbf16>
    %c0_3 = arith.constant 0 : index
    %c0_4 = arith.constant 0 : index
    %3 = vector.load %arg3[%c0_3, %c0_4] : memref<256x128xbf16, #tpu.memory_space<vmem>>, vector<256x128xbf16>
    %cst = arith.constant dense<0.000000e+00> : vector<16x128xf32>
    %4 = tpu.matmul %2, %3, %cst {dimension_numbers = #tpu.dot_dimension_numbers<[1], [0], [0], [1], [0, 0, 1, 1], [], []>} : vector<16x256xbf16>, vector<256x128xbf16>, vector<16x128xf32> -> vector<16x128xf32>
    %c0_5 = arith.constant 0 : index
    %c0_6 = arith.constant 0 : index
    %5 = vector.load %arg4[%c0_5, %c0_6] : memref<1x128xf32, #tpu.memory_space<vmem>>, vector<1x128xf32>
    %6 = vector.broadcast %5 : vector<1x128xf32> to vector<16x128xf32>
    %7 = arith.addf %4, %6 : vector<16x128xf32>
    %8 = math.tanh %7 : vector<16x128xf32>
    %9 = arith.truncf %8 : vector<16x128xf32> to vector<16x128xbf16>
    %c0_7 = arith.constant 0 : index
    %c0_8 = arith.constant 0 : index
    %10 = vector.load %arg5[%c0_7, %c0_8] : memref<128x128xbf16, #tpu.memory_space<vmem>>, vector<128x128xbf16>
    %cst_9 = arith.constant dense<0.000000e+00> : vector<16x128xf32>
    %11 = tpu.matmul %9, %10, %cst_9 {dimension_numbers = #tpu.dot_dimension_numbers<[1], [0], [0], [1], [0, 0, 1, 1], [], []>} : vector<16x128xbf16>, vector<128x128xbf16>, vector<16x128xf32> -> vector<16x128xf32>
    %c0_10 = arith.constant 0 : index
    %c0_11 = arith.constant 0 : index
    %12 = vector.load %arg6[%c0_10, %c0_11] : memref<1x128xf32, #tpu.memory_space<vmem>>, vector<1x128xf32>
    %13 = vector.broadcast %12 : vector<1x128xf32> to vector<16x128xf32>
    %14 = arith.addf %11, %13 : vector<16x128xf32>
    %c0_12 = arith.constant 0 : index
    %c0_13 = arith.constant 0 : index
    %15 = vector.load %arg7[%c0_12, %c0_13] : memref<16x128xf32, #tpu.memory_space<vmem>>, vector<16x128xf32>
    tpu.vector_store %arg7[%c0_12, %c0_13], %14 {strides = array<i32>} : memref<16x128xf32, #tpu.memory_space<vmem>>, vector<16x128xf32>,
    return
  }
  func.func @transform_0(%arg0: i32) -> (i32, i32) {
    %c0_i32 = arith.constant 0 : i32
    %c0_i32_0 = arith.constant 0 : i32
    return %arg0, %c0_i32 : i32, i32
  }
  func.func @transform_1(%arg0: i32) -> (i32, i32) {
    %c0_i32 = arith.constant 0 : i32
    %c0_i32_0 = arith.constant 0 : i32
    return %arg0, %c0_i32 : i32, i32
  }
  func.func @transform_2(%arg0: i32) -> (i32, i32) {
    %c0_i32 = arith.constant 0 : i32
    %c0_i32_0 = arith.constant 0 : i32
    %c0_i32_1 = arith.constant 0 : i32
    return %c0_i32, %c0_i32_0 : i32, i32
  }
  func.func @transform_3(%arg0: i32) -> (i32, i32) {
    %c0_i32 = arith.constant 0 : i32
    %c0_i32_0 = arith.constant 0 : i32
    %c0_i32_1 = arith.constant 0 : i32
    return %c0_i32, %c0_i32_0 : i32, i32
  }
  func.func @transform_4(%arg0: i32) -> (i32, i32) {
    %c0_i32 = arith.constant 0 : i32
    %c0_i32_0 = arith.constant 0 : i32
    %c0_i32_1 = arith.constant 0 : i32
    return %c0_i32, %c0_i32_0 : i32, i32
  }
  func.func @transform_5(%arg0: i32) -> (i32, i32) {
    %c0_i32 = arith.constant 0 : i32
    %c0_i32_0 = arith.constant 0 : i32
    %c0_i32_1 = arith.constant 0 : i32
    return %c0_i32, %c0_i32_0 : i32, i32
  }
  func.func @transform_6(%arg0: i32) -> (i32, i32) {
    %c0_i32 = arith.constant 0 : i32
    %c0_i32_0 = arith.constant 0 : i32
    return %arg0, %c0_i32 : i32, i32
  }
}

</mosaic_0001>

<llo_original>
// kernel: tpu_custom_call.1
$region0: #{tpu_custom_call.1}
  #allocation0 [shape = 'u32[]', space=smem, size = 0x4, offset = 0x4, fixed_abs, tag = 'smem constant byte address 0x4 - core index']
  #allocation1 [shape = 'u32[144,128]{1,0:T(1,128)}', space=vmem, size = 0x12000, scoped, tag = 'internal scratch']
  %s0 = inlined_call_operand.hbm [shape: bf16[16,128], index: 0, kind: input, shape index: {}]
  %s1 = inlined_call_operand.hbm [shape: bf16[16,128], index: 1, kind: input, shape index: {}]
  %s2 = inlined_call_operand.hbm [shape: bf16[256,128], index: 2, kind: input, shape index: {}]
  %s3 = inlined_call_operand.vmem [shape: f32[1,128], index: 3, kind: input, shape index: {}]
  %s4 = inlined_call_operand.hbm [shape: bf16[128,128], index: 4, kind: input, shape index: {}]
  %s5 = inlined_call_operand.vmem [shape: f32[1,128], index: 5, kind: input, shape index: {}]
  %s6 = inlined_call_operand.hbm [shape: f32[16,128], index: 6, kind: output, shape index: {}]
  %s7 = sld [smem:[#allocation0]]
  $region50: #{tpu_custom_call.1} parent=0
    _
  %s9 = ssub.s32 1, %s7
  %s10 = scalar_select 0, %s9, %s7
  $region1: #{tpu_custom_call.1} parent=0
    #allocation2 [shape = 'u8[4096]{0}', space=vmem, size = 0x1000, scoped, tag = 'input window, operand 0, single buffered']
    #allocation3 [shape = 's32[1]{0}', space=sflag, size = 0x4, scoped, tag = 'scoped memory for tpu_custom_call.1']
    #allocation4 [shape = 's32[1]{0}', space=sflag, size = 0x4, scoped, tag = 'scoped memory for tpu_custom_call.1']
    #allocation5 [shape = 'u8[4096]{0}', space=vmem, size = 0x1000, scoped, tag = 'input window, operand 1, single buffered']
    #allocation6 [shape = 's32[1]{0}', space=sflag, size = 0x4, scoped, tag = 'scoped memory for tpu_custom_call.1']
    #allocation7 [shape = 'u8[65536]{0}', space=vmem, size = 0x10000, scoped, tag = 'input window, operand 2, single buffered']
    #allocation8 [shape = 'u8[32768]{0}', space=vmem, size = 0x8000, scoped, tag = 'input window, operand 4, single buffered']
    #allocation9 [shape = 's32[1]{0}', space=sflag, size = 0x4, scoped, tag = 'scoped memory for tpu_custom_call.1']
    #allocation10 [shape = 'u8[8192]{0}', space=vmem, size = 0x2000, scoped, tag = 'output window, operand 0, single buffered']
    %11 = vsyncpa [#allocation3], 0
    %12 = vsyncpa [#allocation6], 0
    %13 = vsyncpa [#allocation9], 0
    %14 = vsyncpa [#allocation4], 0
    // Predicated region
    $region2: #{tpu_custom_call.1} parent=1 // pred_check
      _
    $region3: #{tpu_custom_call.1} parent=1 // pred_check_branch
      %16 = sbr.rel (0) target = $region5
    $region4: #{tpu_custom_call.1} parent=1 // pred_region
      %s18 = ssub.s32 128, 128
      %19 = vsyncadd [#allocation3], %s18
      %s20 = sshll.u32 [#allocation2], 4
      %s21 = int_to_ptr.vmem [resolvable:$true] %s20
      %26 = dma.hbm_to_vmem [thread:$0]  %s0, 128, %s21, [#allocation3], 64, 64, 4
    $region5: #{tpu_custom_call.1} parent=1 // pred_fallthru
      _
    // Predicated region
    $region6: #{tpu_custom_call.1} parent=1 // pred_check
      _
    $region7: #{tpu_custom_call.1} parent=1 // pred_check_branch
      %28 = sbr.rel (0) target = $region9
    $region8: #{tpu_custom_call.1} parent=1 // pred_region
      %s30 = ssub.s32 128, 128
      %31 = vsyncadd [#allocation6], %s30
      %s32 = sshll.u32 [#allocation5], 4
      %s33 = int_to_ptr.vmem [resolvable:$true] %s32
      %38 = dma.hbm_to_vmem [thread:$0]  %s1, 128, %s33, [#allocation6], 64, 64, 4
    $region9: #{tpu_custom_call.1} parent=1 // pred_fallthru
      _
    // Predicated region
    $region10: #{tpu_custom_call.1} parent=1 // pred_check
      _
    $region11: #{tpu_custom_call.1} parent=1 // pred_check_branch
      %40 = sbr.rel (0) target = $region13
    $region12: #{tpu_custom_call.1} parent=1 // pred_region
      %s42 = ssub.s32 2048, 2048
      %43 = vsyncadd [#allocation6], %s42
      %s44 = sshll.u32 [#allocation7], 4
      %s45 = int_to_ptr.vmem [resolvable:$true] %s44
      %50 = dma.hbm_to_vmem [thread:$0]  %s2, 2048, %s45, [#allocation6], 64, 64, 4
    $region13: #{tpu_custom_call.1} parent=1 // pred_fallthru
      _
    // Predicated region
    $region14: #{tpu_custom_call.1} parent=1 // pred_check
      _
    $region15: #{tpu_custom_call.1} parent=1 // pred_check_branch
      %52 = sbr.rel (0) target = $region17
    $region16: #{tpu_custom_call.1} parent=1 // pred_region
      _
    $region17: #{tpu_custom_call.1} parent=1 // pred_fallthru
      _
    // Predicated region
    $region18: #{tpu_custom_call.1} parent=1 // pred_check
      _
    $region19: #{tpu_custom_call.1} parent=1 // pred_check_branch
      %54 = sbr.rel (0) target = $region21
    $region20: #{tpu_custom_call.1} parent=1 // pred_region
      %s56 = ssub.s32 1024, 1024
      %57 = vsyncadd [#allocation9], %s56
      %s58 = sshll.u32 [#allocation8], 4
      %s59 = int_to_ptr.vmem [resolvable:$true] %s58
      %64 = dma.hbm_to_vmem [thread:$0]  %s4, 1024, %s59, [#allocation9], 64, 64, 4
    $region21: #{tpu_custom_call.1} parent=1 // pred_fallthru
      _
    // Predicated region
    $region22: #{tpu_custom_call.1} parent=1 // pred_check
      _
    $region23: #{tpu_custom_call.1} parent=1 // pred_check_branch
      %66 = sbr.rel (0) target = $region25
    $region24: #{tpu_custom_call.1} parent=1 // pred_region
      _
    $region25: #{tpu_custom_call.1} parent=1 // pred_fallthru
      _
    // Predicated region
    $region26: #{tpu_custom_call.1} parent=1 // pred_check
      _
    $region27: #{tpu_custom_call.1} parent=1 // pred_check_branch
      %68 = sbr.rel (0) target = $region29
    $region28: #{tpu_custom_call.1} parent=1 // pred_region
      %69 = dma.done [#allocation3], 128
    $region29: #{tpu_custom_call.1} parent=1 // pred_fallthru
      _
    // Predicated region
    $region30: #{tpu_custom_call.1} parent=1 // pred_check
      _
    $region31: #{tpu_custom_call.1} parent=1 // pred_check_branch
      %71 = sbr.rel (0) target = $region33
    $region32: #{tpu_custom_call.1} parent=1 // pred_region
      %72 = dma.done [#allocation6], 128
    $region33: #{tpu_custom_call.1} parent=1 // pred_fallthru
      _
    // Predicated region
    $region34: #{tpu_custom_call.1} parent=1 // pred_check
      _
    $region35: #{tpu_custom_call.1} parent=1 // pred_check_branch
      %74 = sbr.rel (0) target = $region37
    $region36: #{tpu_custom_call.1} parent=1 // pred_region
      %75 = dma.done [#allocation6], 2048
    $region37: #{tpu_custom_call.1} parent=1 // pred_fallthru
      _
    // Predicated region
    $region38: #{tpu_custom_call.1} parent=1 // pred_check
      _
    $region39: #{tpu_custom_call.1} parent=1 // pred_check_branch
      %77 = sbr.rel (0) target = $region41
    $region40: #{tpu_custom_call.1} parent=1 // pred_region
      %78 = dma.done [#allocation9], 1024
    $region41: #{tpu_custom_call.1} parent=1 // pred_fallthru
      _
    %v80 = vld [vmem:[#allocation2] sm:$0xf]
    %v81 = vld [vmem:[#allocation2 + $0x4] sm:$0xf]
    %v82 = vld [vmem:[#allocation5] sm:$0xf]
    %v83 = vld [vmem:[#allocation5 + $0x4] sm:$0xf]
    %v86 = vunpack.c.l.b16 %v80
    %v87 = vunpack.c.l.b16 %v81
    %v88 = vpack.c.b16 %v87, %v86
    %v92 = vunpack.c.l.b16 %v82
    %v93 = vunpack.c.l.b16 %v83
    %v94 = vpack.c.b16 %v93, %v92
    %v96 = vld [vmem:[#allocation7] sm:$0xf]
    %v97 = vld [vmem:[#allocation7 + $0x4] sm:$0xf]
    %v98 = vld [vmem:[#allocation7 + $0x8] sm:$0xf]
    %v99 = vld [vmem:[#allocation7 + $0xc] sm:$0xf]
    %v100 = vld [vmem:[#allocation7 + $0x10] sm:$0xf]
    %v101 = vld [vmem:[#allocation7 + $0x14] sm:$0xf]
    %v102 = vld [vmem:[#allocation7 + $0x18] sm:$0xf]
    %v103 = vld [vmem:[#allocation7 + $0x1c] sm:$0xf]
    %v104 = vld [vmem:[#allocation7 + $0x20] sm:$0xf]
    %v105 = vld [vmem:[#allocation7 + $0x24] sm:$0xf]
    %v106 = vld [vmem:[#allocation7 + $0x28] sm:$0xf]
    %v107 = vld [vmem:[#allocation7 + $0x2c] sm:$0xf]
    %v108 = vld [vmem:[#allocation7 + $0x30] sm:$0xf]
    %v109 = vld [vmem:[#allocation7 + $0x34] sm:$0xf]
    %v110 = vld [vmem:[#allocation7 + $0x38] sm:$0xf]
    %v111 = vld [vmem:[#allocation7 + $0x3c] sm:$0xf]
    %v112 = vld [vmem:[#allocation7 + $0x40] sm:$0xf]
    %v113 = vld [vmem:[#allocation7 + $0x44] sm:$0xf]
    %v114 = vld [vmem:[#allocation7 + $0x48] sm:$0xf]
    %v115 = vld [vmem:[#allocation7 + $0x4c] sm:$0xf]
    %v116 = vld [vmem:[#allocation7 + $0x50] sm:$0xf]
    %v117 = vld [vmem:[#allocation7 + $0x54] sm:$0xf]
    %v118 = vld [vmem:[#allocation7 + $0x58] sm:$0xf]
    %v119 = vld [vmem:[#allocation7 + $0x5c] sm:$0xf]
    %v120 = vld [vmem:[#allocation7 + $0x60] sm:$0xf]
    %v121 = vld [vmem:[#allocation7 + $0x64] sm:$0xf]
    %v122 = vld [vmem:[#allocation7 + $0x68] sm:$0xf]
    %v123 = vld [vmem:[#allocation7 + $0x6c] sm:$0xf]
    %v124 = vld [vmem:[#allocation7 + $0x70] sm:$0xf]
    %v125 = vld [vmem:[#allocation7 + $0x74] sm:$0xf]
    %v126 = vld [vmem:[#allocation7 + $0x78] sm:$0xf]
    %v127 = vld [vmem:[#allocation7 + $0x7c] sm:$0xf]
    %v128 = vld [vmem:[%s3] sm:$0x1]
    %v130 = vlaneseq
    %v131 = vshrl.u32 %v130, 7
    %v132 = vsub.s32 0, %v131
    %v133 = vrot.slane %v128, %v132
    %v167 = vunpack.c.l.b16 %v96
    %v168 = vunpack.c.l.b16 %v97
    %v169 = vunpack.c.l.b16 %v98
    %v170 = vunpack.c.l.b16 %v99
    %v171 = vunpack.c.l.b16 %v100
    %v172 = vunpack.c.l.b16 %v101
    %v173 = vunpack.c.l.b16 %v102
    %v174 = vunpack.c.l.b16 %v103
    %v175 = vunpack.c.l.b16 %v104
    %v176 = vunpack.c.l.b16 %v105
    %v177 = vunpack.c.l.b16 %v106
    %v178 = vunpack.c.l.b16 %v107
    %v179 = vunpack.c.l.b16 %v108
    %v180 = vunpack.c.l.b16 %v109
    %v181 = vunpack.c.l.b16 %v110
    %v182 = vunpack.c.l.b16 %v111
    %v183 = vunpack.c.l.b16 %v112
    %v184 = vunpack.c.l.b16 %v113
    %v185 = vunpack.c.l.b16 %v114
    %v186 = vunpack.c.l.b16 %v115
    %v187 = vunpack.c.l.b16 %v116
    %v188 = vunpack.c.l.b16 %v117
    %v189 = vunpack.c.l.b16 %v118
    %v190 = vunpack.c.l.b16 %v119
    %v191 = vunpack.c.l.b16 %v120
    %v192 = vunpack.c.l.b16 %v121
    %v193 = vunpack.c.l.b16 %v122
    %v194 = vunpack.c.l.b16 %v123
    %v195 = vunpack.c.l.b16 %v124
    %v196 = vunpack.c.l.b16 %v125
    %v197 = vunpack.c.l.b16 %v126
    %v198 = vunpack.c.l.b16 %v127
    %v199 = vpack.c.b16 %v168, %v167
    %v200 = vpack.c.b16 %v170, %v169
    %v201 = vpack.c.b16 %v172, %v171
    %v202 = vpack.c.b16 %v174, %v173
    %v203 = vpack.c.b16 %v176, %v175
    %v204 = vpack.c.b16 %v178, %v177
    %v205 = vpack.c.b16 %v180, %v179
    %v206 = vpack.c.b16 %v182, %v181
    %v207 = vpack.c.b16 %v184, %v183
    %v208 = vpack.c.b16 %v186, %v185
    %v209 = vpack.c.b16 %v188, %v187
    %v210 = vpack.c.b16 %v190, %v189
    %v211 = vpack.c.b16 %v192, %v191
    %v212 = vpack.c.b16 %v194, %v193
    %v213 = vpack.c.b16 %v196, %v195
    %v214 = vpack.c.b16 %v198, %v197
    %231 = vmatprep.subr.bf16.mxu0 0
    %232 = vmatpush1.bf16.msra.mxu0 %v199
    %233 = vmatprep.subr.bf16.mxu0 0
    %234 = vmatpush1.bf16.msra.mxu0 %v200
    %235 = vmatprep.subr.bf16.mxu0 0
    %236 = vmatpush1.bf16.msra.mxu0 %v201
    %237 = vmatprep.subr.bf16.mxu0 0
    %238 = vmatpush1.bf16.msra.mxu0 %v202
    %239 = vmatprep.subr.bf16.mxu0 0
    %240 = vmatpush1.bf16.msra.mxu0 %v203
    %241 = vmatprep.subr.bf16.mxu0 0
    %242 = vmatpush1.bf16.msra.mxu0 %v204
    %243 = vmatprep.subr.bf16.mxu0 0
    %244 = vmatpush1.bf16.msra.mxu0 %v205
    %245 = vmatprep.subr.bf16.mxu0 0
    %246 = vmatpush1.bf16.msra.mxu0 %v206
    %247 = vmatprep.subr.bf16.mxu0 0
    %248 = vmatpush1.bf16.msra.mxu0 %v207
    %249 = vmatprep.subr.bf16.mxu0 0
    %250 = vmatpush1.bf16.msra.mxu0 %v208
    %251 = vmatprep.subr.bf16.mxu0 0
    %252 = vmatpush1.bf16.msra.mxu0 %v209
    %253 = vmatprep.subr.bf16.mxu0 0
    %254 = vmatpush1.bf16.msra.mxu0 %v210
    %255 = vmatprep.subr.bf16.mxu0 0
    %256 = vmatpush1.bf16.msra.mxu0 %v211
    %257 = vmatprep.subr.bf16.mxu0 0
    %258 = vmatpush1.bf16.msra.mxu0 %v212
    %259 = vmatprep.subr.bf16.mxu0 0
    %260 = vmatpush1.bf16.msra.mxu0 %v213
    %261 = vmatprep.subr.bf16.mxu0 0
    %262 = vmatpush1.bf16.msra.mxu0 %v214
    %263 = vmatprep.mubr.bf16.mxu0 %v94
    %264 = vmatmul.mubr.bf16.gmra.mrb[0].mxu0 %v88
    %v265 = vpop.f32.mrb[0].mxu0
    %v266 = vadd.f32 %v133, %v265
    %v267 = vpop.f32.mrb[0].mxu0
    %v268 = vpop.f32.mrb[0].mxu0
    %v269 = vadd.f32 %v133, %v268
    %v270 = vpop.f32.mrb[0].mxu0
    %271 = vdwg.mxu0
    %v272 = vtanh.pop %v266
    %v273 = vtanh.pop %v269
    %v274 = vpack.c.bf16 %v273, %v272
    %v275 = vld [vmem:[#allocation8] sm:$0xf]
    %v276 = vld [vmem:[#allocation8 + $0x4] sm:$0xf]
    %v277 = vld [vmem:[#allocation8 + $0x8] sm:$0xf]
    %v278 = vld [vmem:[#allocation8 + $0xc] sm:$0xf]
    %v279 = vld [vmem:[#allocation8 + $0x10] sm:$0xf]
    %v280 = vld [vmem:[#allocation8 + $0x14] sm:$0xf]
    %v281 = vld [vmem:[#allocation8 + $0x18] sm:$0xf]
    %v282 = vld [vmem:[#allocation8 + $0x1c] sm:$0xf]
    %v283 = vld [vmem:[#allocation8 + $0x20] sm:$0xf]
    %v284 = vld [vmem:[#allocation8 + $0x24] sm:$0xf]
    %v285 = vld [vmem:[#allocation8 + $0x28] sm:$0xf]
    %v286 = vld [vmem:[#allocation8 + $0x2c] sm:$0xf]
    %v287 = vld [vmem:[#allocation8 + $0x30] sm:$0xf]
    %v288 = vld [vmem:[#allocation8 + $0x34] sm:$0xf]
    %v289 = vld [vmem:[#allocation8 + $0x38] sm:$0xf]
    %v290 = vld [vmem:[#allocation8 + $0x3c] sm:$0xf]
    %v291 = vld [vmem:[%s5] sm:$0x1]
    %v293 = vlaneseq
    %v294 = vshrl.u32 %v293, 7
    %v295 = vsub.s32 0, %v294
    %v296 = vrot.slane %v291, %v295
    %v314 = vunpack.c.l.b16 %v275
    %v315 = vunpack.c.l.b16 %v276
    %v316 = vunpack.c.l.b16 %v277
    %v317 = vunpack.c.l.b16 %v278
    %v318 = vunpack.c.l.b16 %v279
    %v319 = vunpack.c.l.b16 %v280
    %v320 = vunpack.c.l.b16 %v281
    %v321 = vunpack.c.l.b16 %v282
    %v322 = vunpack.c.l.b16 %v283
    %v323 = vunpack.c.l.b16 %v284
    %v324 = vunpack.c.l.b16 %v285
    %v325 = vunpack.c.l.b16 %v286
    %v326 = vunpack.c.l.b16 %v287
    %v327 = vunpack.c.l.b16 %v288
    %v328 = vunpack.c.l.b16 %v289
    %v329 = vunpack.c.l.b16 %v290
    %v330 = vpack.c.b16 %v315, %v314
    %v331 = vpack.c.b16 %v317, %v316
    %v332 = vpack.c.b16 %v319, %v318
    %v333 = vpack.c.b16 %v321, %v320
    %v334 = vpack.c.b16 %v323, %v322
    %v335 = vpack.c.b16 %v325, %v324
    %v336 = vpack.c.b16 %v327, %v326
    %v337 = vpack.c.b16 %v329, %v328
    %346 = vmatprep.subr.bf16.mxu0 0
    %347 = vmatpush1.bf16.msra.mxu0 %v330
    %348 = vmatprep.subr.bf16.mxu0 0
    %349 = vmatpush1.bf16.msra.mxu0 %v331
    %350 = vmatprep.subr.bf16.mxu0 0
    %351 = vmatpush1.bf16.msra.mxu0 %v332
    %352 = vmatprep.subr.bf16.mxu0 0
    %353 = vmatpush1.bf16.msra.mxu0 %v333
    %354 = vmatprep.subr.bf16.mxu0 0
    %355 = vmatpush1.bf16.msra.mxu0 %v334
    %356 = vmatprep.subr.bf16.mxu0 0
    %357 = vmatpush1.bf16.msra.mxu0 %v335
    %358 = vmatprep.subr.bf16.mxu0 0
    %359 = vmatpush1.bf16.msra.mxu0 %v336
    %360 = vmatprep.subr.bf16.mxu0 0
    %361 = vmatpush1.bf16.msra.mxu0 %v337
    %362 = vmatprep.subr.bf16.mxu0 0
    %363 = vmatpush1.bf16.msra.mxu0 0
    %364 = vmatprep.subr.bf16.mxu0 0
    %365 = vmatpush1.bf16.msra.mxu0 0
    %366 = vmatprep.subr.bf16.mxu0 0
    %367 = vmatpush1.bf16.msra.mxu0 0
    %368 = vmatprep.subr.bf16.mxu0 0
    %369 = vmatpush1.bf16.msra.mxu0 0
    %370 = vmatprep.subr.bf16.mxu0 0
    %371 = vmatpush1.bf16.msra.mxu0 0
    %372 = vmatprep.subr.bf16.mxu0 0
    %373 = vmatpush1.bf16.msra.mxu0 0
    %374 = vmatprep.subr.bf16.mxu0 0
    %375 = vmatpush1.bf16.msra.mxu0 0
    %376 = vmatprep.subr.bf16.mxu0 0
    %377 = vmatpush1.bf16.msra.mxu0 0
    %378 = vmatprep.mubr.bf16.mxu0 0
    %379 = vmatmul.mubr.bf16.gmra.mrb[0].mxu0 %v274
    %v380 = vpop.f32.mrb[0].mxu0
    %v381 = vadd.f32 %v296, %v380
    %v382 = vpop.f32.mrb[0].mxu0
    %v383 = vpop.f32.mrb[0].mxu0
    %v384 = vadd.f32 %v296, %v383
    %v385 = vpop.f32.mrb[0].mxu0
    %386 = vdwg.mxu0
    %387 = vst [vmem:[#allocation10] sm:$0xff] %v381
    %388 = vst [vmem:[#allocation10 + $0x8] sm:$0xff] %v384
    // Predicated region
    $region42: #{tpu_custom_call.1} parent=1 // pred_check
      _
    $region43: #{tpu_custom_call.1} parent=1 // pred_check_branch
      %390 = sbr.rel (0) target = $region45
    $region44: #{tpu_custom_call.1} parent=1 // pred_region
      %s392 = ssub.s32 256, 256
      %393 = vsyncadd [#allocation4], %s392
      %s394 = sshll.u32 [#allocation10], 4
      %s395 = int_to_ptr.vmem [resolvable:$true] %s394
      %400 = dma.vmem_to_hbm [thread:$0]  %s395, 256, %s6, [#allocation4], 128, 128, 8
    $region45: #{tpu_custom_call.1} parent=1 // pred_fallthru
      _
    // Predicated region
    $region46: #{tpu_custom_call.1} parent=1 // pred_check
      _
    $region47: #{tpu_custom_call.1} parent=1 // pred_check_branch
      %402 = sbr.rel (0) target = $region49
    $region48: #{tpu_custom_call.1} parent=1 // pred_region
      %403 = dma.done [#allocation4], 256
    $region49: #{tpu_custom_call.1} parent=1 // pred_fallthru
      _
    %404 = vsyncpa [#allocation3], 1
    %405 = vsyncpa [#allocation6], 1
    %406 = vsyncpa [#allocation9], 1
    %407 = vsyncpa [#allocation4], 1

</llo_original>
